<compile_context>
chip_gen: v5e
topology: v5e:2x2
jax: 0.10.0
libtpu: 0.0.40
codegen_flags: <defaults>
</compile_context>

<pallas_src>
import functools

import jax
import jax.numpy as jnp
from jax.experimental import pallas as pl
from jax.experimental.pallas import tpu as pltpu


# ----------------------------- Pallas kernel ------------------------------

def _pixelcnn_param_kernel(x_ref, w1t_ref, b1_ref, w2t_ref, b2_ref, out_ref,
                           xpad_ref, *, H, W, P):
    """One batch element per grid step (channels-first throughout).

    x_ref    : (1, P, H, W)       conditioning params (unpadded, NCHW block)
    w1t_ref  : (F, 4*P)           fused masked 3x3 conv weights (live taps only)
    b1_ref   : (F, 1)
    w2t_ref  : (C, F)             1x1 conv (channel_layer) weights, transposed
    b2_ref   : (C, 1)
    out_ref  : (1, C, H*W)        per-pixel distribution parameters (lane-dense)
    xpad_ref : (P, H+2, W+2)      VMEM scratch holding the 1-pixel halo
    """
    M = H * W

    # Build the zero halo in VMEM (no HBM pad pass in the wrapper).
    # Re-zeroed every step: with ("parallel",) semantics each TensorCore has
    # its own scratch and may never see step 0, so a one-time init is unsafe.
    xpad_ref[...] = jnp.zeros_like(xpad_ref)
    xpad_ref[:, 1:H + 1, 1:W + 1] = x_ref[0]

    # The 4 non-zero taps of the type-A-masked 3x3 conv (padded coords):
    #   (0,0) up-left, (0,1) up, (0,2) up-right, (1,0) left.
    t00 = xpad_ref[:, 0:H, 0:W].reshape(P, M)
    t01 = xpad_ref[:, 0:H, 1:W + 1].reshape(P, M)
    t02 = xpad_ref[:, 0:H, 2:W + 2].reshape(P, M)
    t10 = xpad_ref[:, 1:H + 1, 0:W].reshape(P, M)
    patches = jnp.concatenate([t00, t01, t02, t10], axis=0)      # (4P, M)

    # Fused masked conv: single MXU matmul, f32 accumulate, then bias + ReLU.
    h = jnp.dot(w1t_ref[...], patches,
                preferred_element_type=jnp.float32)              # (F, M)
    h = jnp.maximum(h + b1_ref[...], 0.0)

    # channel_layer 1x1 conv, transposed so the store is lane-dense (M lanes).
    out = jnp.dot(w2t_ref[...], h,
                  preferred_element_type=jnp.float32) + b2_ref[...]   # (C, M)
    out_ref[0] = out.astype(out_ref.dtype)


# ------------------------------ JAX wrapper -------------------------------

class PixelCNNPallas:
    """Mirrors layers/pixelcnn.py::PixelCNN with synthetic sub-modules."""

    # Live taps of the type-A mask, in (dy, dx) padded coordinates.
    _LIVE_TAPS = ((0, 0), (0, 1), (0, 2), (1, 0))

    def __init__(self, event_shape, num_pixelcnn_params, hidden=32, key=None):
        self.event_shape = tuple(event_shape)          # (C, H, W)
        self.num_pixelcnn_params = num_pixelcnn_params
        C, H, W = self.event_shape
        P, F = num_pixelcnn_params, hidden
        self.H, self.W, self.C, self.P, self.F = H, W, C, P, F

        key = jax.random.PRNGKey(0) if key is None else key
        k1, k2, k3, k4 = jax.random.split(key, 4)

        # pixelcnn_net: masked 3x3 conv (type-A mask) weights, HWIO layout.
        w1 = jax.random.normal(k1, (3, 3, P, F), jnp.float32) * 0.1
        mask = jnp.ones((3, 3, 1, 1), jnp.float32)
        mask = mask.at[1, 1:].set(0.0)     # center + right of center
        mask = mask.at[2, :].set(0.0)      # whole bottom row
        self.w1 = w1 * mask
        self.b1 = jax.random.normal(k2, (1, F), jnp.float32) * 0.01

        # channel_layer: 1x1 conv F -> C.
        self.w2 = jax.random.normal(k3, (F, C), jnp.float32) * 0.1
        self.b2 = jax.random.normal(k4, (1, C), jnp.float32) * 0.01

        # --- kernel-side fused/transposed layouts (built once, at init) ---
        # Drop the statically-zero taps and fuse the 4 live ones: (4P, F).
        w1_fused = jnp.concatenate(
            [self.w1[dy, dx] for dy, dx in self._LIVE_TAPS], axis=0)
        self.w1t = jnp.asarray(w1_fused.T)             # (F, 4P)
        self.w2t = jnp.asarray(self.w2.T)              # (C, F)
        self.b1c = self.b1.reshape(F, 1)               # (F, 1)
        self.b2c = self.b2.reshape(C, 1)               # (C, 1)

    def __call__(self, x):
        # Shape validation, identical semantics to the PyTorch forward.
        if x.shape[-3] != self.num_pixelcnn_params:
            raise RuntimeError(
                f"input shape {x.shape}, but event_shape has shape "
                f"{self.event_shape} with num_pixelcnn_params "
                f"{self.num_pixelcnn_params}, expecting "
                f"[_,{(self.num_pixelcnn_params, self.event_shape[1], self.event_shape[2])}]")
        if tuple(x.shape[-2:]) != self.event_shape[-2:]:
            raise RuntimeError(
                f"input shape {x.shape}, but event_shape is {self.event_shape}")

        B = x.shape[0]
        H, W, C, P, F = self.H, self.W, self.C, self.P, self.F

        kernel = functools.partial(_pixelcnn_param_kernel, H=H, W=W, P=P)
        out = pl.pallas_call(
            kernel,
            out_shape=jax.ShapeDtypeStruct((B, C, H * W), jnp.float32),
            grid_spec=pltpu.PrefetchScalarGridSpec(
                num_scalar_prefetch=0,
                grid=(B,),
                in_specs=[
                    pl.BlockSpec((1, P, H, W), lambda b: (b, 0, 0, 0)),
                    pl.BlockSpec((F, 4 * P), lambda b: (0, 0)),
                    pl.BlockSpec((F, 1), lambda b: (0, 0)),
                    pl.BlockSpec((C, F), lambda b: (0, 0)),
                    pl.BlockSpec((C, 1), lambda b: (0, 0)),
                ],
                out_specs=pl.BlockSpec((1, C, H * W), lambda b: (b, 0, 0)),
                scratch_shapes=[pltpu.VMEM((P, H + 2, W + 2), jnp.float32)],
            ),
            compiler_params=pltpu.CompilerParams(
                dimension_semantics=("parallel",)),
        )(x.astype(jnp.float32), self.w1t, self.b1c, self.w2t, self.b2c)

        # Free reshape: (B, C, H*W) -> NCHW (B, C, H, W) distribution params.
        return out.reshape(B, C, H, W)


# ---------------------------- plain-JAX reference --------------------------

def _reference(module, x):
    """Full 9-tap masked conv + 1x1 conv, NHWC math, returned as NCHW."""
    x_nhwc = jnp.transpose(x.astype(jnp.float32), (0, 2, 3, 1))
    xp = jnp.pad(x_nhwc, ((0, 0), (1, 1), (1, 1), (0, 0)))
    H, W = module.H, module.W
    acc = jnp.zeros((x.shape[0], H, W, module.F), jnp.float32)
    for dy in range(3):
        for dx in range(3):
            acc = acc + jnp.einsum("bhwp,pf->bhwf",
                                   xp[:, dy:dy + H, dx:dx + W, :],
                                   module.w1[dy, dx])
    h = jnp.maximum(acc + module.b1[None], 0.0)
    out_nhwc = jnp.einsum("bhwf,fc->bhwc", h, module.w2) + module.b2[None]
    return jnp.transpose(out_nhwc, (0, 3, 1, 2))   # NCHW


if __name__ == "__main__":
    B, P, H, W, C = 2, 4, 16, 16, 3
    root = jax.random.PRNGKey(0)
    k_mod, k_inp = jax.random.split(root)

    module = PixelCNNPallas(event_shape=(C, H, W), num_pixelcnn_params=P,
                            hidden=32, key=k_mod)
    x = jax.random.normal(k_inp, (B, P, H, W), jnp.float32)

    out = jax.block_until_ready(module(x))

    ref = _reference(module, x)
    assert out.shape == (B, C, H, W)
    assert jnp.allclose(out, ref, atol=1e-4, rtol=1e-4)
    print("KERNEL_OK")
</pallas_src>

<mosaic_0001>
module attributes {stable_mosaic.version = 11 : i64} {
  func.func @_pixelcnn_param_kernel(%arg0: i32, %arg1: memref<1x4x16x16xf32, #tpu.memory_space<vmem>>, %arg2: memref<32x16xf32, #tpu.memory_space<vmem>>, %arg3: memref<32x1xf32, #tpu.memory_space<vmem>>, %arg4: memref<3x32xf32, #tpu.memory_space<vmem>>, %arg5: memref<3x1xf32, #tpu.memory_space<vmem>>, %arg6: memref<1x3x256xf32, #tpu.memory_space<vmem>>, %arg7: memref<4x18x18xf32, #tpu.memory_space<vmem>>) attributes {dimension_semantics = [#tpu.dimension_semantics<parallel>], iteration_bounds = array<i64: 2>, scalar_prefetch = 0 : i64, scratch_operands = 1 : i64, tpu.core_type = #tpu.core_type<tc>, window_params = [{transform_indices = @transform_0, window_bounds = array<i64: 1, 4, 16, 16>}, {pipeline_mode = #tpu.pipeline_mode<synchronous>, transform_indices = @transform_1, window_bounds = array<i64: 32, 16>}, {pipeline_mode = #tpu.pipeline_mode<synchronous>, transform_indices = @transform_2, window_bounds = array<i64: 32, 1>}, {pipeline_mode = #tpu.pipeline_mode<synchronous>, transform_indices = @transform_3, window_bounds = array<i64: 3, 32>}, {pipeline_mode = #tpu.pipeline_mode<synchronous>, transform_indices = @transform_4, window_bounds = array<i64: 3, 1>}, {transform_indices = @transform_5, window_bounds = array<i64: 1, 3, 256>}]} {
    %cst = arith.constant 0.000000e+00 : f32
    %0 = vector.broadcast %cst : f32 to vector<4x18x18xf32>
    %c0 = arith.constant 0 : index
    %c0_0 = arith.constant 0 : index
    %c0_1 = arith.constant 0 : index
    %1 = vector.load %arg7[%c0, %c0_0, %c0_1] : memref<4x18x18xf32, #tpu.memory_space<vmem>>, vector<4x18x18xf32>
    tpu.vector_store %arg7[%c0, %c0_0, %c0_1], %0 {strides = array<i32>} : memref<4x18x18xf32, #tpu.memory_space<vmem>>, vector<4x18x18xf32>,
    %c0_2 = arith.constant 0 : index
    %c0_3 = arith.constant 0 : index
    %c0_4 = arith.constant 0 : index
    %c0_5 = arith.constant 0 : index
    %2 = vector.load %arg1[%c0_2, %c0_3, %c0_4, %c0_5] : memref<1x4x16x16xf32, #tpu.memory_space<vmem>>, vector<1x4x16x16xf32>
    %3 = vector.shape_cast %2 : vector<1x4x16x16xf32> to vector<4x16x16xf32>
    %c0_6 = arith.constant 0 : index
    %c1 = arith.constant 1 : index
    %c1_7 = arith.constant 1 : index
    %4 = vector.load %arg7[%c0_6, %c1, %c1_7] : memref<4x18x18xf32, #tpu.memory_space<vmem>>, vector<4x16x16xf32>
    tpu.vector_store %arg7[%c0_6, %c1, %c1_7], %3 {strides = array<i32>} : memref<4x18x18xf32, #tpu.memory_space<vmem>>, vector<4x16x16xf32>,
    %c0_8 = arith.constant 0 : index
    %c0_9 = arith.constant 0 : index
    %c0_10 = arith.constant 0 : index
    %5 = vector.load %arg7[%c0_8, %c0_9, %c0_10] : memref<4x18x18xf32, #tpu.memory_space<vmem>>, vector<4x16x16xf32>
    %6 = vector.shape_cast %5 : vector<4x16x16xf32> to vector<4x256xf32>
    %c0_11 = arith.constant 0 : index
    %c0_12 = arith.constant 0 : index
    %c1_13 = arith.constant 1 : index
    %7 = vector.load %arg7[%c0_11, %c0_12, %c1_13] : memref<4x18x18xf32, #tpu.memory_space<vmem>>, vector<4x16x16xf32>
    %8 = vector.shape_cast %7 : vector<4x16x16xf32> to vector<4x256xf32>
    %c0_14 = arith.constant 0 : index
    %c0_15 = arith.constant 0 : index
    %c2 = arith.constant 2 : index
    %9 = vector.load %arg7[%c0_14, %c0_15, %c2] : memref<4x18x18xf32, #tpu.memory_space<vmem>>, vector<4x16x16xf32>
    %10 = vector.shape_cast %9 : vector<4x16x16xf32> to vector<4x256xf32>
    %c0_16 = arith.constant 0 : index
    %c1_17 = arith.constant 1 : index
    %c0_18 = arith.constant 0 : index
    %11 = vector.load %arg7[%c0_16, %c1_17, %c0_18] : memref<4x18x18xf32, #tpu.memory_space<vmem>>, vector<4x16x16xf32>
    %12 = vector.shape_cast %11 : vector<4x16x16xf32> to vector<4x256xf32>
    %13 = tpu.concatenate %6, %8, %10, %12 in 0 : vector<4x256xf32>, vector<4x256xf32>, vector<4x256xf32>, vector<4x256xf32> -> vector<16x256xf32>
    %c0_19 = arith.constant 0 : index
    %c0_20 = arith.constant 0 : index
    %14 = vector.load %arg2[%c0_19, %c0_20] : memref<32x16xf32, #tpu.memory_space<vmem>>, vector<32x16xf32>
    %cst_21 = arith.constant dense<0.000000e+00> : vector<32x256xf32>
    %15 = tpu.matmul %14, %13, %cst_21 {dimension_numbers = #tpu.dot_dimension_numbers<[1], [0], [0], [1], [0, 0, 1, 1], [], []>} : vector<32x16xf32>, vector<16x256xf32>, vector<32x256xf32> -> vector<32x256xf32>
    %c0_22 = arith.constant 0 : index
    %c0_23 = arith.constant 0 : index
    %16 = vector.load %arg3[%c0_22, %c0_23] : memref<32x1xf32, #tpu.memory_space<vmem>>, vector<32x1xf32>
    %17 = vector.broadcast %16 : vector<32x1xf32> to vector<32x256xf32>
    %18 = arith.addf %15, %17 : vector<32x256xf32>
    %cst_24 = arith.constant 0.000000e+00 : f32
    %19 = vector.broadcast %cst_24 : f32 to vector<32x256xf32>
    %20 = arith.maximumf %18, %19 : vector<32x256xf32>
    %c0_25 = arith.constant 0 : index
    %c0_26 = arith.constant 0 : index
    %21 = vector.load %arg4[%c0_25, %c0_26] : memref<3x32xf32, #tpu.memory_space<vmem>>, vector<3x32xf32>
    %cst_27 = arith.constant dense<0.000000e+00> : vector<3x256xf32>
    %22 = tpu.matmul %21, %20, %cst_27 {dimension_numbers = #tpu.dot_dimension_numbers<[1], [0], [0], [1], [0, 0, 1, 1], [], []>} : vector<3x32xf32>, vector<32x256xf32>, vector<3x256xf32> -> vector<3x256xf32>
    %c0_28 = arith.constant 0 : index
    %c0_29 = arith.constant 0 : index
    %23 = vector.load %arg5[%c0_28, %c0_29] : memref<3x1xf32, #tpu.memory_space<vmem>>, vector<3x1xf32>
    %24 = vector.broadcast %23 : vector<3x1xf32> to vector<3x256xf32>
    %25 = arith.addf %22, %24 : vector<3x256xf32>
    %c0_30 = arith.constant 0 : index
    %c0_31 = arith.constant 0 : index
    %c0_32 = arith.constant 0 : index
    %26 = vector.load %arg6[%c0_30, %c0_31, %c0_32] : memref<1x3x256xf32, #tpu.memory_space<vmem>>, vector<1x3x256xf32>
    %27 = vector.shape_cast %26 : vector<1x3x256xf32> to vector<3x256xf32>
    %28 = vector.shape_cast %25 : vector<3x256xf32> to vector<1x3x256xf32>
    tpu.vector_store %arg6[%c0_30, %c0_31, %c0_32], %28 {strides = array<i32>} : memref<1x3x256xf32, #tpu.memory_space<vmem>>, vector<1x3x256xf32>,
    return
  }
  func.func @transform_0(%arg0: i32) -> (i32, i32, i32, i32) {
    %c0_i32 = arith.constant 0 : i32
    %c0_i32_0 = arith.constant 0 : i32
    %c0_i32_1 = arith.constant 0 : i32
    %c0_i32_2 = arith.constant 0 : i32
    return %arg0, %c0_i32, %c0_i32_0, %c0_i32_1 : i32, i32, i32, i32
  }
  func.func @transform_1(%arg0: i32) -> (i32, i32) {
    %c0_i32 = arith.constant 0 : i32
    %c0_i32_0 = arith.constant 0 : i32
    %c0_i32_1 = arith.constant 0 : i32
    return %c0_i32, %c0_i32_0 : i32, i32
  }
  func.func @transform_2(%arg0: i32) -> (i32, i32) {
    %c0_i32 = arith.constant 0 : i32
    %c0_i32_0 = arith.constant 0 : i32
    %c0_i32_1 = arith.constant 0 : i32
    return %c0_i32, %c0_i32_0 : i32, i32
  }
  func.func @transform_3(%arg0: i32) -> (i32, i32) {
    %c0_i32 = arith.constant 0 : i32
    %c0_i32_0 = arith.constant 0 : i32
    %c0_i32_1 = arith.constant 0 : i32
    return %c0_i32, %c0_i32_0 : i32, i32
  }
  func.func @transform_4(%arg0: i32) -> (i32, i32) {
    %c0_i32 = arith.constant 0 : i32
    %c0_i32_0 = arith.constant 0 : i32
    %c0_i32_1 = arith.constant 0 : i32
    return %c0_i32, %c0_i32_0 : i32, i32
  }
  func.func @transform_5(%arg0: i32) -> (i32, i32, i32) {
    %c0_i32 = arith.constant 0 : i32
    %c0_i32_0 = arith.constant 0 : i32
    %c0_i32_1 = arith.constant 0 : i32
    return %arg0, %c0_i32, %c0_i32_0 : i32, i32, i32
  }
}

</mosaic_0001>

<llo_original>
// kernel: tpu_custom_call.1
$region0: #{tpu_custom_call.1}
  #allocation0 [shape = 'u32[]', space=smem, size = 0x4, offset = 0x4, fixed_abs, tag = 'smem constant byte address 0x4 - core index']
  #allocation1 [shape = 'u32[72,128]{1,0:T(1,128)}', space=vmem, size = 0x9000, scoped, tag = 'internal scratch']
  #allocation2 [shape = 'f32[4,18,18]{2,1,0:T(8,128)}', space=vmem, size = 0xc000, scoped, tag = 'scratch operand']
  %s0 = inlined_call_operand.hbm [shape: f32[2,4,16,16], index: 0, kind: input, shape index: {}]
  %s1 = inlined_call_operand.vmem [shape: f32[32,16], index: 1, kind: input, shape index: {}]
  %s2 = inlined_call_operand.vmem [shape: f32[32,1], index: 2, kind: input, shape index: {}]
  %s3 = inlined_call_operand.vmem [shape: f32[3,32], index: 3, kind: input, shape index: {}]
  %s4 = inlined_call_operand.vmem [shape: f32[3,1], index: 4, kind: input, shape index: {}]
  %s5 = inlined_call_operand.vmem [shape: f32[2,3,256], index: 5, kind: output, shape index: {}]
  %s6 = sld [smem:[#allocation0]]
  $region57: #{tpu_custom_call.1} parent=0
    _
  %s8 = ssub.s32 1, %s6
  %s9 = scalar_select 0, %s8, %s6
  $region1: #{tpu_custom_call.1} parent=0
    #allocation3 [shape = 'u8[65536]{0}', space=vmem, size = 0x10000, scoped, tag = 'input window, operand 0']
    #allocation4 [shape = 's32[2]{0}', space=sflag, size = 0x8, scoped, tag = 'scoped memory for tpu_custom_call.1']
    %10 = vsyncpa [#allocation4], 0
    %s11 = scalar_lea.sflag [#allocation4], 1
    %12 = vsyncpa %s11, 0
    loop: start=0, step=1, limit=4
    $region2: #{tpu_custom_call.1} parent=1 // loop_pre_header
      _
    $region3: #{tpu_custom_call.1} parent=1 // loop_header
      %s14 = sphi 0, %s18
      %p15 = scmp.ge.s32.totalorder %s14, 4
      %s24 = sphi 0, %s26
      %s27 = sphi 0, %s24
      %s28 = sphi 0, %s27
      %s44 = sphi 0, %s28
      %s48 = sphi 0, %s48
      %s50 = sphi 0, %s48
      %s51 = sphi 0, %s50
      %s65 = sphi 0, %s51
      %s69 = sphi 0, %s69
      %s71 = sphi 0, %s69
      %s72 = sphi 0, %s71
      %s86 = sphi 0, %s72
      %s90 = sphi 0, %s90
      %s92 = sphi 0, %s90
      %s93 = sphi 0, %s92
      %s107 = sphi 0, %s93
      %s111 = sphi 0, %s111
      %s113 = sphi 0, %s111
      %s114 = sphi 0, %s113
      %s128 = sphi 0, %s114
      %s134 = sphi 0, %s136
      %s137 = sphi 0, %s134
      %s138 = sphi 0, %s137
      %s154 = sphi 0, %s138
    $region4: #{tpu_custom_call.1} parent=1 // loop_header_branch
      %17 = sbr.rel (%p15) target = $region8
    $region5: #{tpu_custom_call.1} parent=1 // loop_body
      %s19 = ssub.s32 %s14, 1
      %s20 = ssub.s32 %s14, 2
      %s21 = sadd.s32 %s14, 1
      %s22 = ssub.s32 %s14, %s21
      %p23 = scmp.eq.s32.totalorder %s22, 0
      %s25 = sadd.s32 %s24, 1
      %s26 = scalar_select %p23, %s24, %s25
      %p29 = pneg %p23
      %p30 = scmp.eq.s32.totalorder %s14, 1
      %p31 = por %p29, %p30
      %p32 = scmp.ne.s32.totalorder %s24, %s27
      %p33 = scmp.eq.s32.totalorder %s14, 0
      %p34 = por %p32, %p33
      %p35 = scmp.ne.s32.totalorder %s24, %s27
      %p36 = scmp.eq.s32.totalorder %s19, 1
      %p37 = por %p35, %p36
      %p38 = scmp.ne.s32.totalorder %s27, %s28
      %p39 = scmp.eq.s32.totalorder %s19, 0
      %p40 = por %p38, %p39
      %p41 = scmp.ne.s32.totalorder %s27, %s28
      %p42 = scmp.eq.s32.totalorder %s20, 1
      %p43 = por %p41, %p42
      %p45 = scmp.ne.s32.totalorder %s28, %s44
      %p46 = scmp.eq.s32.totalorder %s20, 0
      %p47 = por %p45, %p46
      %s49 = sadd.s32 %s48, 1
      %p52 = scmp.eq.s32.totalorder %s14, 1
      %p53 = scmp.ne.s32.totalorder %s48, %s50
      %p54 = scmp.eq.s32.totalorder %s14, 0
      %p55 = por %p53, %p54
      %p56 = scmp.ne.s32.totalorder %s48, %s50
      %p57 = scmp.eq.s32.totalorder %s19, 1
      %p58 = por %p56, %p57
      %p59 = scmp.ne.s32.totalorder %s50, %s51
      %p60 = scmp.eq.s32.totalorder %s19, 0
      %p61 = por %p59, %p60
      %p62 = scmp.ne.s32.totalorder %s50, %s51
      %p63 = scmp.eq.s32.totalorder %s20, 1
      %p64 = por %p62, %p63
      %p66 = scmp.ne.s32.totalorder %s51, %s65
      %p67 = scmp.eq.s32.totalorder %s20, 0
      %p68 = por %p66, %p67
      %s70 = sadd.s32 %s69, 1
      %p73 = scmp.eq.s32.totalorder %s14, 1
      %p74 = scmp.ne.s32.totalorder %s69, %s71
      %p75 = scmp.eq.s32.totalorder %s14, 0
      %p76 = por %p74, %p75
      %p77 = scmp.ne.s32.totalorder %s69, %s71
      %p78 = scmp.eq.s32.totalorder %s19, 1
      %p79 = por %p77, %p78
      %p80 = scmp.ne.s32.totalorder %s71, %s72
      %p81 = scmp.eq.s32.totalorder %s19, 0
      %p82 = por %p80, %p81
      %p83 = scmp.ne.s32.totalorder %s71, %s72
      %p84 = scmp.eq.s32.totalorder %s20, 1
      %p85 = por %p83, %p84
      %p87 = scmp.ne.s32.totalorder %s72, %s86
      %p88 = scmp.eq.s32.totalorder %s20, 0
      %p89 = por %p87, %p88
      %s91 = sadd.s32 %s90, 1
      %p94 = scmp.eq.s32.totalorder %s14, 1
      %p95 = scmp.ne.s32.totalorder %s90, %s92
      %p96 = scmp.eq.s32.totalorder %s14, 0
      %p97 = por %p95, %p96
      %p98 = scmp.ne.s32.totalorder %s90, %s92
      %p99 = scmp.eq.s32.totalorder %s19, 1
      %p100 = por %p98, %p99
      %p101 = scmp.ne.s32.totalorder %s92, %s93
      %p102 = scmp.eq.s32.totalorder %s19, 0
      %p103 = por %p101, %p102
      %p104 = scmp.ne.s32.totalorder %s92, %s93
      %p105 = scmp.eq.s32.totalorder %s20, 1
      %p106 = por %p104, %p105
      %p108 = scmp.ne.s32.totalorder %s93, %s107
      %p109 = scmp.eq.s32.totalorder %s20, 0
      %p110 = por %p108, %p109
      %s112 = sadd.s32 %s111, 1
      %p115 = scmp.eq.s32.totalorder %s14, 1
      %p116 = scmp.ne.s32.totalorder %s111, %s113
      %p117 = scmp.eq.s32.totalorder %s14, 0
      %p118 = por %p116, %p117
      %p119 = scmp.ne.s32.totalorder %s111, %s113
      %p120 = scmp.eq.s32.totalorder %s19, 1
      %p121 = por %p119, %p120
      %p122 = scmp.ne.s32.totalorder %s113, %s114
      %p123 = scmp.eq.s32.totalorder %s19, 0
      %p124 = por %p122, %p123
      %p125 = scmp.ne.s32.totalorder %s113, %s114
      %p126 = scmp.eq.s32.totalorder %s20, 1
      %p127 = por %p125, %p126
      %p129 = scmp.ne.s32.totalorder %s114, %s128
      %p130 = scmp.eq.s32.totalorder %s20, 0
      %p131 = por %p129, %p130
      %s132 = ssub.s32 %s14, %s21
      %p133 = scmp.eq.s32.totalorder %s132, 0
      %s135 = sadd.s32 %s134, 1
      %s136 = scalar_select %p133, %s134, %s135
      %p139 = pneg %p133
      %p140 = scmp.eq.s32.totalorder %s14, 1
      %p141 = por %p139, %p140
      %p142 = scmp.ne.s32.totalorder %s134, %s137
      %p143 = scmp.eq.s32.totalorder %s14, 0
      %p144 = por %p142, %p143
      %p145 = scmp.ne.s32.totalorder %s134, %s137
      %p146 = scmp.eq.s32.totalorder %s19, 1
      %p147 = por %p145, %p146
      %p148 = scmp.ne.s32.totalorder %s137, %s138
      %p149 = scmp.eq.s32.totalorder %s19, 0
      %p150 = por %p148, %p149
      %p151 = scmp.ne.s32.totalorder %s137, %s138
      %p152 = scmp.eq.s32.totalorder %s20, 1
      %p153 = por %p151, %p152
      %p155 = scmp.ne.s32.totalorder %s138, %s154
      %p156 = scmp.eq.s32.totalorder %s20, 0
      %p157 = por %p155, %p156
      %p158 = scmp.le.s32.totalorder 1, %s14
      %p159 = scmp.lt.s32.totalorder %s14, 3
      %p160 = pnand %p158, %p159
      %p161 = pneg %p160
      // Predicated region
      $region9: #{tpu_custom_call.1} parent=5 // pred_check
        _
      $region10: #{tpu_custom_call.1} parent=5 // pred_check_branch
        %163 = sbr.rel (%p160) target = $region12
      $region11: #{tpu_custom_call.1} parent=5 // pred_region
        %s164 = ssub.s32 %s14, 1
        // Predicated region
        $region13: #{tpu_custom_call.1} parent=11 // pred_check
          %p165 = pneg %p61
        $region14: #{tpu_custom_call.1} parent=11 // pred_check_branch
          %167 = sbr.rel (%p165) target = $region16
        $region15: #{tpu_custom_call.1} parent=11 // pred_region
          _
        $region16: #{tpu_custom_call.1} parent=11 // pred_fallthru
          _
        // Predicated region
        $region17: #{tpu_custom_call.1} parent=11 // pred_check
          %p168 = pneg %p82
        $region18: #{tpu_custom_call.1} parent=11 // pred_check_branch
          %170 = sbr.rel (%p168) target = $region20
        $region19: #{tpu_custom_call.1} parent=11 // pred_region
          _
        $region20: #{tpu_custom_call.1} parent=11 // pred_fallthru
          _
        // Predicated region
        $region21: #{tpu_custom_call.1} parent=11 // pred_check
          %p171 = pneg %p103
        $region22: #{tpu_custom_call.1} parent=11 // pred_check_branch
          %173 = sbr.rel (%p171) target = $region24
        $region23: #{tpu_custom_call.1} parent=11 // pred_region
          _
        $region24: #{tpu_custom_call.1} parent=11 // pred_fallthru
          _
        // Predicated region
        $region25: #{tpu_custom_call.1} parent=11 // pred_check
          %p174 = pneg %p124
        $region26: #{tpu_custom_call.1} parent=11 // pred_check_branch
          %176 = sbr.rel (%p174) target = $region28
        $region27: #{tpu_custom_call.1} parent=11 // pred_region
          _
        $region28: #{tpu_custom_call.1} parent=11 // pred_fallthru
          _
      $region12: #{tpu_custom_call.1} parent=5 // pred_fallthru
        _
      %p177 = scmp.lt.s32.totalorder %s14, 2
      // Predicated region
      $region29: #{tpu_custom_call.1} parent=5 // pred_check
        %p178 = pneg %p177
      $region30: #{tpu_custom_call.1} parent=5 // pred_check_branch
        %180 = sbr.rel (%p178) target = $region32
      $region31: #{tpu_custom_call.1} parent=5 // pred_region
        // Predicated region
        $region33: #{tpu_custom_call.1} parent=31 // pred_check
          %p181 = pneg %p34
        $region34: #{tpu_custom_call.1} parent=31 // pred_check_branch
          %183 = sbr.rel (%p181) target = $region36
        $region35: #{tpu_custom_call.1} parent=31 // pred_region
          %s184 = sand.u32 %s24, 1
          %s185 = scalar_lea.sflag [#allocation4], %s184
          %s186 = sand.u32 %s24, 1
          %s187 = smul.addr %s186, 64
          %s188 = scalar_lea.vmem [#allocation3], %s187
          %190 = vsyncadd %s185, 0
          %s191 = smul.addr %s14, 8
          %s192 = smul.addr %s191, 8
          %s193 = scalar_lea.hbm %s0, %s192
          %s194 = sshll.u32 %s193, 4
          %s195 = int_to_ptr.hbm [resolvable:$true] %s194
          %s196 = sshll.u32 %s188, 4
          %s197 = int_to_ptr.vmem [resolvable:$true] %s196
          %202 = dma.hbm_to_vmem [thread:$0]  %s195, 1024, %s197, %s185, 128, 128, 8
        $region36: #{tpu_custom_call.1} parent=31 // pred_fallthru
          _
      $region32: #{tpu_custom_call.1} parent=5 // pred_fallthru
        _
      %p203 = scmp.le.s32.totalorder 1, %s14
      %p204 = scmp.lt.s32.totalorder %s14, 3
      %p205 = pnand %p203, %p204
      %p206 = pneg %p205
      // Predicated region
      $region37: #{tpu_custom_call.1} parent=5 // pred_check
        _
      $region38: #{tpu_custom_call.1} parent=5 // pred_check_branch
        %208 = sbr.rel (%p205) target = $region40
      $region39: #{tpu_custom_call.1} parent=5 // pred_region
        %s209 = ssub.s32 %s14, 1
        %s210 = sand.u32 %s27, 1
        %s211 = scalar_lea.sflag [#allocation4], %s210
        %s212 = sand.u32 %s27, 1
        %s213 = smul.addr %s212, 64
        %s214 = scalar_lea.vmem [#allocation3], %s213
        // Predicated region
        $region41: #{tpu_custom_call.1} parent=39 // pred_check
          %p215 = pneg %p40
        $region42: #{tpu_custom_call.1} parent=39 // pred_check_branch
          %217 = sbr.rel (%p215) target = $region44
        $region43: #{tpu_custom_call.1} parent=39 // pred_region
          %219 = dma.done %s211, 1024
        $region44: #{tpu_custom_call.1} parent=39 // pred_fallthru
          _
        %s220 = sand.u32 %s27, 1
        %s221 = scalar_lea.sflag [#allocation4], %s220
        %s222 = sand.u32 %s27, 1
        %s223 = smul.addr %s222, 64
        %s224 = scalar_lea.vmem [#allocation3], %s223
        %p225 = pneg %p40
        %p226 = pneg %p37
        %p227 = pneg %p61
        %p228 = pneg %p58
        %p229 = pneg %p82
        %p230 = pneg %p79
        %p231 = pneg %p103
        %p232 = pneg %p100
        %p233 = pneg %p124
        %p234 = pneg %p121
        %p235 = pneg %p150
        %p236 = pneg %p147
        %p237 = scmp.lt.s32.totalorder %s19, 1
        %s238 = scalar_select %p237, %s19, 1
        %s239 = smul.addr %s238, 2
        %s240 = smul.addr %s239, 4
        %s241 = scalar_lea.vmem %s5, %s240
        %p242 = scmp.lt.s32.totalorder %s19, 1
        %s243 = scalar_select %p242, %s19, 1
        %s244 = smul.addr %s243, 2
        %s245 = smul.addr %s244, 4
        %s246 = scalar_lea.vmem %s5, %s245
        %vm247 = vcmask 146432
        %248 = vst.msk [vmem:[#allocation2] sm:$0xff] %vm247, 0.0
        %249 = vst.msk [vmem:[#allocation2 + $0x8] sm:$0xff] %vm247, 0.0
        %vm250 = vcmask 140288
        %251 = vst.msk [vmem:[#allocation2 + $0x10] sm:$0x3] %vm250, 0.0
        %252 = vst.msk [vmem:[#allocation2 + $0x18] sm:$0xff] %vm247, 0.0
        %253 = vst.msk [vmem:[#allocation2 + $0x20] sm:$0xff] %vm247, 0.0
        %254 = vst.msk [vmem:[#allocation2 + $0x28] sm:$0x3] %vm250, 0.0
        %255 = vst.msk [vmem:[#allocation2 + $0x30] sm:$0xff] %vm247, 0.0
        %256 = vst.msk [vmem:[#allocation2 + $0x38] sm:$0xff] %vm247, 0.0
        %257 = vst.msk [vmem:[#allocation2 + $0x40] sm:$0x3] %vm250, 0.0
        %258 = vst.msk [vmem:[#allocation2 + $0x48] sm:$0xff] %vm247, 0.0
        %259 = vst.msk [vmem:[#allocation2 + $0x50] sm:$0xff] %vm247, 0.0
        %260 = vst.msk [vmem:[#allocation2 + $0x58] sm:$0x3] %vm250, 0.0
        %v261 = vld [vmem:[%s214] sm:$0xff]
        %v262 = vld [vmem:[%s214 + $0x8] sm:$0xff]
        %v263 = vld [vmem:[%s214 + $0x10] sm:$0xff]
        %v264 = vld [vmem:[%s214 + $0x18] sm:$0xff]
        %v265 = vld [vmem:[%s214 + $0x20] sm:$0xff]
        %v266 = vld [vmem:[%s214 + $0x28] sm:$0xff]
        %v267 = vld [vmem:[%s214 + $0x30] sm:$0xff]
        %v268 = vld [vmem:[%s214 + $0x38] sm:$0xff]
        %277 = vrot.lane.b32.xlu0 %v261, 1
        %v278 = vpop.permute.xlu0 %277
        %279 = vrot.lane.b32.xlu0 %v262, 1
        %v280 = vpop.permute.xlu0 %279
        %281 = vrot.lane.b32.xlu0 %v263, 1
        %v282 = vpop.permute.xlu0 %281
        %283 = vrot.lane.b32.xlu0 %v264, 1
        %v284 = vpop.permute.xlu0 %283
        %285 = vrot.lane.b32.xlu0 %v265, 1
        %v286 = vpop.permute.xlu0 %285
        %287 = vrot.lane.b32.xlu0 %v266, 1
        %v288 = vpop.permute.xlu0 %287
        %289 = vrot.lane.b32.xlu0 %v267, 1
        %v290 = vpop.permute.xlu0 %289
        %291 = vrot.lane.b32.xlu0 %v268, 1
        %v292 = vpop.permute.xlu0 %291
        %vm301 = vcmask 138248
        %302 = vst.msk [vmem:[#allocation2 + $0x1] sm:$0xff] %vm301, %v278
        %303 = vst.msk [vmem:[#allocation2 + $0x9] sm:$0xff] %vm301, %v280
        %304 = vst.msk [vmem:[#allocation2 + $0x19] sm:$0xff] %vm301, %v282
        %305 = vst.msk [vmem:[#allocation2 + $0x21] sm:$0xff] %vm301, %v284
        %306 = vst.msk [vmem:[#allocation2 + $0x31] sm:$0xff] %vm301, %v286
        %307 = vst.msk [vmem:[#allocation2 + $0x39] sm:$0xff] %vm301, %v288
        %308 = vst.msk [vmem:[#allocation2 + $0x49] sm:$0xff] %vm301, %v290
        %309 = vst.msk [vmem:[#allocation2 + $0x51] sm:$0xff] %vm301, %v292
        %v310 = vld [vmem:[#allocation2] sm:$0xff]
        %v311 = vld [vmem:[#allocation2 + $0x8] sm:$0xff]
        %v312 = vld [vmem:[#allocation2 + $0x18] sm:$0xff]
        %v313 = vld [vmem:[#allocation2 + $0x20] sm:$0xff]
        %v314 = vld [vmem:[#allocation2 + $0x30] sm:$0xff]
        %v315 = vld [vmem:[#allocation2 + $0x38] sm:$0xff]
        %v316 = vld [vmem:[#allocation2 + $0x48] sm:$0xff]
        %v317 = vld [vmem:[#allocation2 + $0x50] sm:$0xff]
        %v318 = vrot.slane %v314, 4
        %vm319 = vcmask 1047556
        %v320 = vsel %vm319, %v318, %v310
        %v321 = vrot.slane %v310, 4
        %v322 = vsel %vm319, %v314, %v321
        %v324 = vunpack.c.l.s4 1983009808
        %v325 = vunpack.c.0.s8 %v324
        %v326 = vperm.slane %v320, %v325
        %v328 = vunpack.c.l.s4 1983009808
        %v329 = vunpack.c.0.s8 %v328
        %v330 = vperm.slane %v322, %v329
        %v331 = vrot.slane %v316, 4
        %v332 = vsel %vm319, %v331, %v312
        %v333 = vrot.slane %v312, 4
        %v334 = vsel %vm319, %v316, %v333
        %v336 = vunpack.c.l.s4 1983009808
        %v337 = vunpack.c.0.s8 %v336
        %v338 = vperm.slane %v332, %v337
        %v340 = vunpack.c.l.s4 1983009808
        %v341 = vunpack.c.0.s8 %v340
        %v342 = vperm.slane %v334, %v341
        %v343 = vrot.slane %v338, 4
        %v344 = vsel %vm319, %v343, %v326
        %v345 = vrot.slane %v326, 4
        %v346 = vsel %vm319, %v338, %v345
        %v348 = vunpack.c.l.s4 1934713408
        %v349 = vunpack.c.0.s8 %v348
        %v350 = vperm.slane %v344, %v349
        %v352 = vunpack.c.l.s4 1934713408
        %v353 = vunpack.c.0.s8 %v352
        %v354 = vperm.slane %v346, %v353
        %v355 = vrot.slane %v342, 4
        %v356 = vsel %vm319, %v355, %v330
        %v357 = vrot.slane %v330, 4
        %v358 = vsel %vm319, %v342, %v357
        %v360 = vunpack.c.l.s4 1934713408
        %v361 = vunpack.c.0.s8 %v360
        %v362 = vperm.slane %v356, %v361
        %v364 = vunpack.c.l.s4 1934713408
        %v365 = vunpack.c.0.s8 %v364
        %v366 = vperm.slane %v358, %v365
        %v367 = vrot.slane %v350, 4
        %v368 = vsel %vm319, 0.0, %v367
        %v369 = vrot.slane %v354, 4
        %v370 = vsel %vm319, 0.0, %v369
        %v371 = vrot.slane %v362, 4
        %v372 = vsel %vm319, 0.0, %v371
        %v373 = vrot.slane %v366, 4
        %v374 = vsel %vm319, 0.0, %v373
        %v375 = vrot.slane %v315, 4
        %v376 = vsel %vm319, %v375, %v311
        %v377 = vrot.slane %v311, 4
        %v378 = vsel %vm319, %v315, %v377
        %v380 = vunpack.c.l.s4 1983009808
        %v381 = vunpack.c.0.s8 %v380
        %v382 = vperm.slane %v376, %v381
        %v384 = vunpack.c.l.s4 1983009808
        %v385 = vunpack.c.0.s8 %v384
        %v386 = vperm.slane %v378, %v385
        %v387 = vrot.slane %v317, 4
        %v388 = vsel %vm319, %v387, %v313
        %v389 = vrot.slane %v313, 4
        %v390 = vsel %vm319, %v317, %v389
        %v392 = vunpack.c.l.s4 1983009808
        %v393 = vunpack.c.0.s8 %v392
        %v394 = vperm.slane %v388, %v393
        %v396 = vunpack.c.l.s4 1983009808
        %v397 = vunpack.c.0.s8 %v396
        %v398 = vperm.slane %v390, %v397
        %v399 = vrot.slane %v394, 4
        %v400 = vsel %vm319, %v399, %v382
        %v401 = vrot.slane %v382, 4
        %v402 = vsel %vm319, %v394, %v401
        %v404 = vunpack.c.l.s4 1934713408
        %v405 = vunpack.c.0.s8 %v404
        %v406 = vperm.slane %v400, %v405
        %v408 = vunpack.c.l.s4 1934713408
        %v409 = vunpack.c.0.s8 %v408
        %v410 = vperm.slane %v402, %v409
        %v411 = vrot.slane %v398, 4
        %v412 = vsel %vm319, %v411, %v386
        %v413 = vrot.slane %v386, 4
        %v414 = vsel %vm319, %v398, %v413
        %v416 = vunpack.c.l.s4 1934713408
        %v417 = vunpack.c.0.s8 %v416
        %v418 = vperm.slane %v412, %v417
        %v420 = vunpack.c.l.s4 1934713408
        %v421 = vunpack.c.0.s8 %v420
        %v422 = vperm.slane %v414, %v421
        %v423 = vrot.slane %v406, 4
        %v424 = vsel %vm319, 0.0, %v423
        %v425 = vrot.slane %v410, 4
        %v426 = vsel %vm319, 0.0, %v425
        %v427 = vrot.slane %v418, 4
        %v428 = vsel %vm319, 0.0, %v427
        %v429 = vrot.slane %v422, 4
        %v430 = vsel %vm319, 0.0, %v429
        %432 = vrot.lane.b32.xlu0 %v368, 16
        %v433 = vpop.permute.xlu0 %432
        %436 = vrot.lane.b32.xlu0 %v354, 32
        %v437 = vpop.permute.xlu0 %436
        %440 = vrot.lane.b32.xlu0 %v370, 48
        %v441 = vpop.permute.xlu0 %440
        %444 = vrot.lane.b32.xlu0 %v362, 64
        %v445 = vpop.permute.xlu0 %444
        %448 = vrot.lane.b32.xlu0 %v372, 80
        %v449 = vpop.permute.xlu0 %448
        %452 = vrot.lane.b32.xlu0 %v366, 96
        %v453 = vpop.permute.xlu0 %452
        %456 = vrot.lane.b32.xlu0 %v374, 112
        %v457 = vpop.permute.xlu0 %456
        %460 = vrot.lane.b32.xlu0 %v424, 16
        %v461 = vpop.permute.xlu0 %460
        %464 = vrot.lane.b32.xlu0 %v410, 32
        %v465 = vpop.permute.xlu0 %464
        %468 = vrot.lane.b32.xlu0 %v426, 48
        %v469 = vpop.permute.xlu0 %468
        %472 = vrot.lane.b32.xlu0 %v418, 64
        %v473 = vpop.permute.xlu0 %472
        %476 = vrot.lane.b32.xlu0 %v428, 80
        %v477 = vpop.permute.xlu0 %476
        %480 = vrot.lane.b32.xlu0 %v422, 96
        %v481 = vpop.permute.xlu0 %480
        %484 = vrot.lane.b32.xlu0 %v430, 112
        %v485 = vpop.permute.xlu0 %484
        %vm487 = vcmask 130048
        %v488 = vsel %vm487, %v350, %v433
        %vm489 = vcmask 261120
        %v490 = vsel %vm489, %v488, %v437
        %vm491 = vcmask 392192
        %v492 = vsel %vm491, %v490, %v441
        %vm493 = vcmask 523264
        %v494 = vsel %vm493, %v492, %v445
        %vm495 = vcmask 654336
        %v496 = vsel %vm495, %v494, %v449
        %vm497 = vcmask 785408
        %v498 = vsel %vm497, %v496, %v453
        %vm499 = vcmask 916480
        %v500 = vsel %vm499, %v498, %v457
        %v501 = vsel %vm487, %v406, %v461
        %v502 = vsel %vm489, %v501, %v465
        %v503 = vsel %vm491, %v502, %v469
        %v504 = vsel %vm493, %v503, %v473
        %v505 = vsel %vm495, %v504, %v477
        %v506 = vsel %vm497, %v505, %v481
        %v507 = vsel %vm499, %v506, %v485
        %516 = vrot.lane.b32.xlu0 %v310, 127
        %v517 = vpop.permute.xlu0 %516
        %518 = vrot.lane.b32.xlu0 %v311, 127
        %v519 = vpop.permute.xlu0 %518
        %520 = vrot.lane.b32.xlu0 %v312, 127
        %v521 = vpop.permute.xlu0 %520
        %522 = vrot.lane.b32.xlu0 %v313, 127
        %v523 = vpop.permute.xlu0 %522
        %524 = vrot.lane.b32.xlu0 %v314, 127
        %v525 = vpop.permute.xlu0 %524
        %526 = vrot.lane.b32.xlu0 %v315, 127
        %v527 = vpop.permute.xlu0 %526
        %528 = vrot.lane.b32.xlu0 %v316, 127
        %v529 = vpop.permute.xlu0 %528
        %530 = vrot.lane.b32.xlu0 %v317, 127
        %v531 = vpop.permute.xlu0 %530
        %v540 = vrot.slane %v525, 4
        %v541 = vsel %vm319, %v540, %v517
        %v542 = vrot.slane %v517, 4
        %v543 = vsel %vm319, %v525, %v542
        %v545 = vunpack.c.l.s4 1983009808
        %v546 = vunpack.c.0.s8 %v545
        %v547 = vperm.slane %v541, %v546
        %v549 = vunpack.c.l.s4 1983009808
        %v550 = vunpack.c.0.s8 %v549
        %v551 = vperm.slane %v543, %v550
        %v552 = vrot.slane %v529, 4
        %v553 = vsel %vm319, %v552, %v521
        %v554 = vrot.slane %v521, 4
        %v555 = vsel %vm319, %v529, %v554
        %v557 = vunpack.c.l.s4 1983009808
        %v558 = vunpack.c.0.s8 %v557
        %v559 = vperm.slane %v553, %v558
        %v561 = vunpack.c.l.s4 1983009808
        %v562 = vunpack.c.0.s8 %v561
        %v563 = vperm.slane %v555, %v562
        %v564 = vrot.slane %v559, 4
        %v565 = vsel %vm319, %v564, %v547
        %v566 = vrot.slane %v547, 4
        %v567 = vsel %vm319, %v559, %v566
        %v569 = vunpack.c.l.s4 1934713408
        %v570 = vunpack.c.0.s8 %v569
        %v571 = vperm.slane %v565, %v570
        %v573 = vunpack.c.l.s4 1934713408
        %v574 = vunpack.c.0.s8 %v573
        %v575 = vperm.slane %v567, %v574
        %v576 = vrot.slane %v563, 4
        %v577 = vsel %vm319, %v576, %v551
        %v578 = vrot.slane %v551, 4
        %v579 = vsel %vm319, %v563, %v578
        %v581 = vunpack.c.l.s4 1934713408
        %v582 = vunpack.c.0.s8 %v581
        %v583 = vperm.slane %v577, %v582
        %v585 = vunpack.c.l.s4 1934713408
        %v586 = vunpack.c.0.s8 %v585
        %v587 = vperm.slane %v579, %v586
        %v588 = vrot.slane %v571, 4
        %v589 = vsel %vm319, 0.0, %v588
        %v590 = vrot.slane %v575, 4
        %v591 = vsel %vm319, 0.0, %v590
        %v592 = vrot.slane %v583, 4
        %v593 = vsel %vm319, 0.0, %v592
        %v594 = vrot.slane %v587, 4
        %v595 = vsel %vm319, 0.0, %v594
        %v596 = vrot.slane %v527, 4
        %v597 = vsel %vm319, %v596, %v519
        %v598 = vrot.slane %v519, 4
        %v599 = vsel %vm319, %v527, %v598
        %v601 = vunpack.c.l.s4 1983009808
        %v602 = vunpack.c.0.s8 %v601
        %v603 = vperm.slane %v597, %v602
        %v605 = vunpack.c.l.s4 1983009808
        %v606 = vunpack.c.0.s8 %v605
        %v607 = vperm.slane %v599, %v606
        %v608 = vrot.slane %v531, 4
        %v609 = vsel %vm319, %v608, %v523
        %v610 = vrot.slane %v523, 4
        %v611 = vsel %vm319, %v531, %v610
        %v613 = vunpack.c.l.s4 1983009808
        %v614 = vunpack.c.0.s8 %v613
        %v615 = vperm.slane %v609, %v614
        %v617 = vunpack.c.l.s4 1983009808
        %v618 = vunpack.c.0.s8 %v617
        %v619 = vperm.slane %v611, %v618
        %v620 = vrot.slane %v615, 4
        %v621 = vsel %vm319, %v620, %v603
        %v622 = vrot.slane %v603, 4
        %v623 = vsel %vm319, %v615, %v622
        %v625 = vunpack.c.l.s4 1934713408
        %v626 = vunpack.c.0.s8 %v625
        %v627 = vperm.slane %v621, %v626
        %v629 = vunpack.c.l.s4 1934713408
        %v630 = vunpack.c.0.s8 %v629
        %v631 = vperm.slane %v623, %v630
        %v632 = vrot.slane %v619, 4
        %v633 = vsel %vm319, %v632, %v607
        %v634 = vrot.slane %v607, 4
        %v635 = vsel %vm319, %v619, %v634
        %v637 = vunpack.c.l.s4 1934713408
        %v638 = vunpack.c.0.s8 %v637
        %v639 = vperm.slane %v633, %v638
        %v641 = vunpack.c.l.s4 1934713408
        %v642 = vunpack.c.0.s8 %v641
        %v643 = vperm.slane %v635, %v642
        %v644 = vrot.slane %v627, 4
        %v645 = vsel %vm319, 0.0, %v644
        %v646 = vrot.slane %v631, 4
        %v647 = vsel %vm319, 0.0, %v646
        %v648 = vrot.slane %v639, 4
        %v649 = vsel %vm319, 0.0, %v648
        %v650 = vrot.slane %v643, 4
        %v651 = vsel %vm319, 0.0, %v650
        %653 = vrot.lane.b32.xlu0 %v589, 16
        %v654 = vpop.permute.xlu0 %653
        %657 = vrot.lane.b32.xlu0 %v575, 32
        %v658 = vpop.permute.xlu0 %657
        %661 = vrot.lane.b32.xlu0 %v591, 48
        %v662 = vpop.permute.xlu0 %661
        %665 = vrot.lane.b32.xlu0 %v583, 64
        %v666 = vpop.permute.xlu0 %665
        %669 = vrot.lane.b32.xlu0 %v593, 80
        %v670 = vpop.permute.xlu0 %669
        %673 = vrot.lane.b32.xlu0 %v587, 96
        %v674 = vpop.permute.xlu0 %673
        %677 = vrot.lane.b32.xlu0 %v595, 112
        %v678 = vpop.permute.xlu0 %677
        %681 = vrot.lane.b32.xlu0 %v645, 16
        %v682 = vpop.permute.xlu0 %681
        %685 = vrot.lane.b32.xlu0 %v631, 32
        %v686 = vpop.permute.xlu0 %685
        %689 = vrot.lane.b32.xlu0 %v647, 48
        %v690 = vpop.permute.xlu0 %689
        %693 = vrot.lane.b32.xlu0 %v639, 64
        %v694 = vpop.permute.xlu0 %693
        %697 = vrot.lane.b32.xlu0 %v649, 80
        %v698 = vpop.permute.xlu0 %697
        %701 = vrot.lane.b32.xlu0 %v643, 96
        %v702 = vpop.permute.xlu0 %701
        %705 = vrot.lane.b32.xlu0 %v651, 112
        %v706 = vpop.permute.xlu0 %705
        %v708 = vsel %vm487, %v571, %v654
        %v709 = vsel %vm489, %v708, %v658
        %v710 = vsel %vm491, %v709, %v662
        %v711 = vsel %vm493, %v710, %v666
        %v712 = vsel %vm495, %v711, %v670
        %v713 = vsel %vm497, %v712, %v674
        %v714 = vsel %vm499, %v713, %v678
        %v715 = vsel %vm487, %v627, %v682
        %v716 = vsel %vm489, %v715, %v686
        %v717 = vsel %vm491, %v716, %v690
        %v718 = vsel %vm493, %v717, %v694
        %v719 = vsel %vm495, %v718, %v698
        %v720 = vsel %vm497, %v719, %v702
        %v721 = vsel %vm499, %v720, %v706
        %722 = vrot.lane.b32.xlu0 %v310, 126
        %v723 = vpop.permute.xlu0 %722
        %724 = vrot.lane.b32.xlu0 %v311, 126
        %v725 = vpop.permute.xlu0 %724
        %726 = vrot.lane.b32.xlu0 %v312, 126
        %v727 = vpop.permute.xlu0 %726
        %728 = vrot.lane.b32.xlu0 %v313, 126
        %v729 = vpop.permute.xlu0 %728
        %730 = vrot.lane.b32.xlu0 %v314, 126
        %v731 = vpop.permute.xlu0 %730
        %732 = vrot.lane.b32.xlu0 %v315, 126
        %v733 = vpop.permute.xlu0 %732
        %734 = vrot.lane.b32.xlu0 %v316, 126
        %v735 = vpop.permute.xlu0 %734
        %736 = vrot.lane.b32.xlu0 %v317, 126
        %v737 = vpop.permute.xlu0 %736
        %v746 = vrot.slane %v731, 4
        %v747 = vsel %vm319, %v746, %v723
        %v748 = vrot.slane %v723, 4
        %v749 = vsel %vm319, %v731, %v748
        %v751 = vunpack.c.l.s4 1983009808
        %v752 = vunpack.c.0.s8 %v751
        %v753 = vperm.slane %v747, %v752
        %v755 = vunpack.c.l.s4 1983009808
        %v756 = vunpack.c.0.s8 %v755
        %v757 = vperm.slane %v749, %v756
        %v758 = vrot.slane %v735, 4
        %v759 = vsel %vm319, %v758, %v727
        %v760 = vrot.slane %v727, 4
        %v761 = vsel %vm319, %v735, %v760
        %v763 = vunpack.c.l.s4 1983009808
        %v764 = vunpack.c.0.s8 %v763
        %v765 = vperm.slane %v759, %v764
        %v767 = vunpack.c.l.s4 1983009808
        %v768 = vunpack.c.0.s8 %v767
        %v769 = vperm.slane %v761, %v768
        %v770 = vrot.slane %v765, 4
        %v771 = vsel %vm319, %v770, %v753
        %v772 = vrot.slane %v753, 4
        %v773 = vsel %vm319, %v765, %v772
        %v775 = vunpack.c.l.s4 1934713408
        %v776 = vunpack.c.0.s8 %v775
        %v777 = vperm.slane %v771, %v776
        %v779 = vunpack.c.l.s4 1934713408
        %v780 = vunpack.c.0.s8 %v779
        %v781 = vperm.slane %v773, %v780
        %v782 = vrot.slane %v769, 4
        %v783 = vsel %vm319, %v782, %v757
        %v784 = vrot.slane %v757, 4
        %v785 = vsel %vm319, %v769, %v784
        %v787 = vunpack.c.l.s4 1934713408
        %v788 = vunpack.c.0.s8 %v787
        %v789 = vperm.slane %v783, %v788
        %v791 = vunpack.c.l.s4 1934713408
        %v792 = vunpack.c.0.s8 %v791
        %v793 = vperm.slane %v785, %v792
        %v794 = vrot.slane %v777, 4
        %v795 = vsel %vm319, 0.0, %v794
        %v796 = vrot.slane %v781, 4
        %v797 = vsel %vm319, 0.0, %v796
        %v798 = vrot.slane %v789, 4
        %v799 = vsel %vm319, 0.0, %v798
        %v800 = vrot.slane %v793, 4
        %v801 = vsel %vm319, 0.0, %v800
        %v802 = vrot.slane %v733, 4
        %v803 = vsel %vm319, %v802, %v725
        %v804 = vrot.slane %v725, 4
        %v805 = vsel %vm319, %v733, %v804
        %v807 = vunpack.c.l.s4 1983009808
        %v808 = vunpack.c.0.s8 %v807
        %v809 = vperm.slane %v803, %v808
        %v811 = vunpack.c.l.s4 1983009808
        %v812 = vunpack.c.0.s8 %v811
        %v813 = vperm.slane %v805, %v812
        %v814 = vrot.slane %v737, 4
        %v815 = vsel %vm319, %v814, %v729
        %v816 = vrot.slane %v729, 4
        %v817 = vsel %vm319, %v737, %v816
        %v819 = vunpack.c.l.s4 1983009808
        %v820 = vunpack.c.0.s8 %v819
        %v821 = vperm.slane %v815, %v820
        %v823 = vunpack.c.l.s4 1983009808
        %v824 = vunpack.c.0.s8 %v823
        %v825 = vperm.slane %v817, %v824
        %v826 = vrot.slane %v821, 4
        %v827 = vsel %vm319, %v826, %v809
        %v828 = vrot.slane %v809, 4
        %v829 = vsel %vm319, %v821, %v828
        %v831 = vunpack.c.l.s4 1934713408
        %v832 = vunpack.c.0.s8 %v831
        %v833 = vperm.slane %v827, %v832
        %v835 = vunpack.c.l.s4 1934713408
        %v836 = vunpack.c.0.s8 %v835
        %v837 = vperm.slane %v829, %v836
        %v838 = vrot.slane %v825, 4
        %v839 = vsel %vm319, %v838, %v813
        %v840 = vrot.slane %v813, 4
        %v841 = vsel %vm319, %v825, %v840
        %v843 = vunpack.c.l.s4 1934713408
        %v844 = vunpack.c.0.s8 %v843
        %v845 = vperm.slane %v839, %v844
        %v847 = vunpack.c.l.s4 1934713408
        %v848 = vunpack.c.0.s8 %v847
        %v849 = vperm.slane %v841, %v848
        %v850 = vrot.slane %v833, 4
        %v851 = vsel %vm319, 0.0, %v850
        %v852 = vrot.slane %v837, 4
        %v853 = vsel %vm319, 0.0, %v852
        %v854 = vrot.slane %v845, 4
        %v855 = vsel %vm319, 0.0, %v854
        %v856 = vrot.slane %v849, 4
        %v857 = vsel %vm319, 0.0, %v856
        %859 = vrot.lane.b32.xlu0 %v795, 16
        %v860 = vpop.permute.xlu0 %859
        %863 = vrot.lane.b32.xlu0 %v781, 32
        %v864 = vpop.permute.xlu0 %863
        %867 = vrot.lane.b32.xlu0 %v797, 48
        %v868 = vpop.permute.xlu0 %867
        %871 = vrot.lane.b32.xlu0 %v789, 64
        %v872 = vpop.permute.xlu0 %871
        %875 = vrot.lane.b32.xlu0 %v799, 80
        %v876 = vpop.permute.xlu0 %875
        %879 = vrot.lane.b32.xlu0 %v793, 96
        %v880 = vpop.permute.xlu0 %879
        %883 = vrot.lane.b32.xlu0 %v801, 112
        %v884 = vpop.permute.xlu0 %883
        %887 = vrot.lane.b32.xlu0 %v851, 16
        %v888 = vpop.permute.xlu0 %887
        %891 = vrot.lane.b32.xlu0 %v837, 32
        %v892 = vpop.permute.xlu0 %891
        %895 = vrot.lane.b32.xlu0 %v853, 48
        %v896 = vpop.permute.xlu0 %895
        %899 = vrot.lane.b32.xlu0 %v845, 64
        %v900 = vpop.permute.xlu0 %899
        %903 = vrot.lane.b32.xlu0 %v855, 80
        %v904 = vpop.permute.xlu0 %903
        %907 = vrot.lane.b32.xlu0 %v849, 96
        %v908 = vpop.permute.xlu0 %907
        %911 = vrot.lane.b32.xlu0 %v857, 112
        %v912 = vpop.permute.xlu0 %911
        %v914 = vsel %vm487, %v777, %v860
        %v915 = vsel %vm489, %v914, %v864
        %v916 = vsel %vm491, %v915, %v868
        %v917 = vsel %vm493, %v916, %v872
        %v918 = vsel %vm495, %v917, %v876
        %v919 = vsel %vm497, %v918, %v880
        %v920 = vsel %vm499, %v919, %v884
        %v921 = vsel %vm487, %v833, %v888
        %v922 = vsel %vm489, %v921, %v892
        %v923 = vsel %vm491, %v922, %v896
        %v924 = vsel %vm493, %v923, %v900
        %v925 = vsel %vm495, %v924, %v904
        %v926 = vsel %vm497, %v925, %v908
        %v927 = vsel %vm499, %v926, %v912
        %v928 = vld [vmem:[#allocation2 + $0x1] sm:$0xff]
        %v929 = vld [vmem:[#allocation2 + $0x9] sm:$0xff]
        %v930 = vld [vmem:[#allocation2 + $0x19] sm:$0xff]
        %v931 = vld [vmem:[#allocation2 + $0x21] sm:$0xff]
        %v932 = vld [vmem:[#allocation2 + $0x31] sm:$0xff]
        %v933 = vld [vmem:[#allocation2 + $0x39] sm:$0xff]
        %v934 = vld [vmem:[#allocation2 + $0x49] sm:$0xff]
        %v935 = vld [vmem:[#allocation2 + $0x51] sm:$0xff]
        %v936 = vrot.slane %v932, 4
        %v937 = vsel %vm319, %v936, %v928
        %v938 = vrot.slane %v928, 4
        %v939 = vsel %vm319, %v932, %v938
        %v941 = vunpack.c.l.s4 1983009808
        %v942 = vunpack.c.0.s8 %v941
        %v943 = vperm.slane %v937, %v942
        %v945 = vunpack.c.l.s4 1983009808
        %v946 = vunpack.c.0.s8 %v945
        %v947 = vperm.slane %v939, %v946
        %v948 = vrot.slane %v934, 4
        %v949 = vsel %vm319, %v948, %v930
        %v950 = vrot.slane %v930, 4
        %v951 = vsel %vm319, %v934, %v950
        %v953 = vunpack.c.l.s4 1983009808
        %v954 = vunpack.c.0.s8 %v953
        %v955 = vperm.slane %v949, %v954
        %v957 = vunpack.c.l.s4 1983009808
        %v958 = vunpack.c.0.s8 %v957
        %v959 = vperm.slane %v951, %v958
        %v960 = vrot.slane %v955, 4
        %v961 = vsel %vm319, %v960, %v943
        %v962 = vrot.slane %v943, 4
        %v963 = vsel %vm319, %v955, %v962
        %v965 = vunpack.c.l.s4 1934713408
        %v966 = vunpack.c.0.s8 %v965
        %v967 = vperm.slane %v961, %v966
        %v969 = vunpack.c.l.s4 1934713408
        %v970 = vunpack.c.0.s8 %v969
        %v971 = vperm.slane %v963, %v970
        %v972 = vrot.slane %v959, 4
        %v973 = vsel %vm319, %v972, %v947
        %v974 = vrot.slane %v947, 4
        %v975 = vsel %vm319, %v959, %v974
        %v977 = vunpack.c.l.s4 1934713408
        %v978 = vunpack.c.0.s8 %v977
        %v979 = vperm.slane %v973, %v978
        %v981 = vunpack.c.l.s4 1934713408
        %v982 = vunpack.c.0.s8 %v981
        %v983 = vperm.slane %v975, %v982
        %v984 = vrot.slane %v967, 4
        %v985 = vsel %vm319, 0.0, %v984
        %v986 = vrot.slane %v971, 4
        %v987 = vsel %vm319, 0.0, %v986
        %v988 = vrot.slane %v979, 4
        %v989 = vsel %vm319, 0.0, %v988
        %v990 = vrot.slane %v983, 4
        %v991 = vsel %vm319, 0.0, %v990
        %v992 = vrot.slane %v933, 4
        %v993 = vsel %vm319, %v992, %v929
        %v994 = vrot.slane %v929, 4
        %v995 = vsel %vm319, %v933, %v994
        %v997 = vunpack.c.l.s4 1983009808
        %v998 = vunpack.c.0.s8 %v997
        %v999 = vperm.slane %v993, %v998
        %v1001 = vunpack.c.l.s4 1983009808
        %v1002 = vunpack.c.0.s8 %v1001
        %v1003 = vperm.slane %v995, %v1002
        %v1004 = vrot.slane %v935, 4
        %v1005 = vsel %vm319, %v1004, %v931
        %v1006 = vrot.slane %v931, 4
        %v1007 = vsel %vm319, %v935, %v1006
        %v1009 = vunpack.c.l.s4 1983009808
        %v1010 = vunpack.c.0.s8 %v1009
        %v1011 = vperm.slane %v1005, %v1010
        %v1013 = vunpack.c.l.s4 1983009808
        %v1014 = vunpack.c.0.s8 %v1013
        %v1015 = vperm.slane %v1007, %v1014
        %v1016 = vrot.slane %v1011, 4
        %v1017 = vsel %vm319, %v1016, %v999
        %v1018 = vrot.slane %v999, 4
        %v1019 = vsel %vm319, %v1011, %v1018
        %v1021 = vunpack.c.l.s4 1934713408
        %v1022 = vunpack.c.0.s8 %v1021
        %v1023 = vperm.slane %v1017, %v1022
        %v1025 = vunpack.c.l.s4 1934713408
        %v1026 = vunpack.c.0.s8 %v1025
        %v1027 = vperm.slane %v1019, %v1026
        %v1028 = vrot.slane %v1015, 4
        %v1029 = vsel %vm319, %v1028, %v1003
        %v1030 = vrot.slane %v1003, 4
        %v1031 = vsel %vm319, %v1015, %v1030
        %v1033 = vunpack.c.l.s4 1934713408
        %v1034 = vunpack.c.0.s8 %v1033
        %v1035 = vperm.slane %v1029, %v1034
        %v1037 = vunpack.c.l.s4 1934713408
        %v1038 = vunpack.c.0.s8 %v1037
        %v1039 = vperm.slane %v1031, %v1038
        %v1040 = vrot.slane %v1023, 4
        %v1041 = vsel %vm319, 0.0, %v1040
        %v1042 = vrot.slane %v1027, 4
        %v1043 = vsel %vm319, 0.0, %v1042
        %v1044 = vrot.slane %v1035, 4
        %v1045 = vsel %vm319, 0.0, %v1044
        %v1046 = vrot.slane %v1039, 4
        %v1047 = vsel %vm319, 0.0, %v1046
        %1049 = vrot.lane.b32.xlu0 %v985, 16
        %v1050 = vpop.permute.xlu0 %1049
        %1053 = vrot.lane.b32.xlu0 %v971, 32
        %v1054 = vpop.permute.xlu0 %1053
        %1057 = vrot.lane.b32.xlu0 %v987, 48
        %v1058 = vpop.permute.xlu0 %1057
        %1061 = vrot.lane.b32.xlu0 %v979, 64
        %v1062 = vpop.permute.xlu0 %1061
        %1065 = vrot.lane.b32.xlu0 %v989, 80
        %v1066 = vpop.permute.xlu0 %1065
        %1069 = vrot.lane.b32.xlu0 %v983, 96
        %v1070 = vpop.permute.xlu0 %1069
        %1073 = vrot.lane.b32.xlu0 %v991, 112
        %v1074 = vpop.permute.xlu0 %1073
        %1077 = vrot.lane.b32.xlu0 %v1041, 16
        %v1078 = vpop.permute.xlu0 %1077
        %1081 = vrot.lane.b32.xlu0 %v1027, 32
        %v1082 = vpop.permute.xlu0 %1081
        %1085 = vrot.lane.b32.xlu0 %v1043, 48
        %v1086 = vpop.permute.xlu0 %1085
        %1089 = vrot.lane.b32.xlu0 %v1035, 64
        %v1090 = vpop.permute.xlu0 %1089
        %1093 = vrot.lane.b32.xlu0 %v1045, 80
        %v1094 = vpop.permute.xlu0 %1093
        %1097 = vrot.lane.b32.xlu0 %v1039, 96
        %v1098 = vpop.permute.xlu0 %1097
        %1101 = vrot.lane.b32.xlu0 %v1047, 112
        %v1102 = vpop.permute.xlu0 %1101
        %v1104 = vsel %vm487, %v967, %v1050
        %v1105 = vsel %vm489, %v1104, %v1054
        %v1106 = vsel %vm491, %v1105, %v1058
        %v1107 = vsel %vm493, %v1106, %v1062
        %v1108 = vsel %vm495, %v1107, %v1066
        %v1109 = vsel %vm497, %v1108, %v1070
        %v1110 = vsel %vm499, %v1109, %v1074
        %v1111 = vsel %vm487, %v1023, %v1078
        %v1112 = vsel %vm489, %v1111, %v1082
        %v1113 = vsel %vm491, %v1112, %v1086
        %v1114 = vsel %vm493, %v1113, %v1090
        %v1115 = vsel %vm495, %v1114, %v1094
        %v1116 = vsel %vm497, %v1115, %v1098
        %v1117 = vsel %vm499, %v1116, %v1102
        %v1120 = vrot.slane %v714, 4
        %v1121 = vrot.slane %v721, 4
        %v1126 = vrot.slane %v1110, 4
        %v1127 = vrot.slane %v1117, 4
        %vm1130 = vcmask 1043456
        %v1131 = vsel %vm1130, %v500, %v1120
        %v1132 = vsel %vm1130, %v507, %v1121
        %v1133 = vsel %vm1130, %v920, %v1126
        %v1134 = vsel %vm1130, %v927, %v1127
        %v1135 = vld [vmem:[%s1] sm:$0xff]
        %v1136 = vld [vmem:[%s1 + $0x8] sm:$0xff]
        %v1137 = vld [vmem:[%s1 + $0x10] sm:$0xff]
        %v1138 = vld [vmem:[%s1 + $0x18] sm:$0xff]
        %v1139 = vld [vmem:[%s2] sm:$0xff]
        %v1140 = vld [vmem:[%s2 + $0x8] sm:$0xff]
        %v1141 = vld [vmem:[%s2 + $0x10] sm:$0xff]
        %v1142 = vld [vmem:[%s2 + $0x18] sm:$0xff]
        %1144 = vset.pattern.permute.xlu0 0
        %1145 = vperm.xlu0 %1144, %v1139
        %v1146 = vpop.permute.xlu0 %1145
        %1149 = vset.pattern.permute.xlu0 0
        %1150 = vperm.xlu0 %1149, %v1140
        %v1151 = vpop.permute.xlu0 %1150
        %1154 = vset.pattern.permute.xlu0 0
        %1155 = vperm.xlu0 %1154, %v1141
        %v1156 = vpop.permute.xlu0 %1155
        %1159 = vset.pattern.permute.xlu0 0
        %1160 = vperm.xlu0 %1159, %v1142
        %v1161 = vpop.permute.xlu0 %1160
        %v1164 = vsel %vm487, %v1135, 0
        %v1167 = vsel %vm487, %v1136, 0
        %v1170 = vsel %vm487, %v1137, 0
        %v1173 = vsel %vm487, %v1138, 0
        %1175 = vmatpush.msra.mxu0 0.0
        %1176 = vmatpush.msra.mxu0 0.0
        %1177 = vmatpush.msra.mxu0 0.0
        %1178 = vmatpush.msra.mxu0 0.0
        %1179 = vmatpush.msra.mxu0 0.0
        %1180 = vmatpush.msra.mxu0 0.0
        %1181 = vmatpush.msra.mxu0 0.0
        %1182 = vmatpush.msra.mxu0 0.0
        %1183 = vmatpush.msra.mxu0 0.0
        %1184 = vmatpush.msra.mxu0 0.0
        %1185 = vmatpush.msra.mxu0 0.0
        %1186 = vmatpush.msra.mxu0 0.0
        %1187 = vmatpush.msra.mxu0 0.0
        %1188 = vmatpush.msra.mxu0 0.0
        %1189 = vmatpush.msra.mxu0 %v1133
        %1190 = vmatpush.msra.mxu0 %v1131
        %1191 = vmatmul.f32.gmra.mxu0 %v1164
        %v1192 = vpop.f32.mrf.mxu0
        %v1193 = vadd.f32 %v1146, %v1192
        %1194 = vmatmul.f32.gmra.mxu0 %v1167
        %v1195 = vpop.f32.mrf.mxu0
        %v1196 = vadd.f32 %v1151, %v1195
        %1197 = vmatmul.f32.gmra.mxu0 %v1170
        %v1198 = vpop.f32.mrf.mxu0
        %v1199 = vadd.f32 %v1156, %v1198
        %1200 = vmatmul.f32.gmra.mxu0 %v1173
        %v1201 = vpop.f32.mrf.mxu0
        %v1202 = vadd.f32 %v1161, %v1201
        %1203 = vdwg.mxu0
        %1204 = vmatpush.msra.mxu0 0.0
        %1205 = vmatpush.msra.mxu0 0.0
        %1206 = vmatpush.msra.mxu0 0.0
        %1207 = vmatpush.msra.mxu0 0.0
        %1208 = vmatpush.msra.mxu0 0.0
        %1209 = vmatpush.msra.mxu0 0.0
        %1210 = vmatpush.msra.mxu0 0.0
        %1211 = vmatpush.msra.mxu0 0.0
        %1212 = vmatpush.msra.mxu0 0.0
        %1213 = vmatpush.msra.mxu0 0.0
        %1214 = vmatpush.msra.mxu0 0.0
        %1215 = vmatpush.msra.mxu0 0.0
        %1216 = vmatpush.msra.mxu0 0.0
        %1217 = vmatpush.msra.mxu0 0.0
        %1218 = vmatpush.msra.mxu0 %v1134
        %1219 = vmatpush.msra.mxu0 %v1132
        %1220 = vmatmul.f32.gmra.mxu0 %v1164
        %v1221 = vpop.f32.mrf.mxu0
        %v1222 = vadd.f32 %v1146, %v1221
        %1223 = vmatmul.f32.gmra.mxu0 %v1167
        %v1224 = vpop.f32.mrf.mxu0
        %v1225 = vadd.f32 %v1151, %v1224
        %1226 = vmatmul.f32.gmra.mxu0 %v1170
        %v1227 = vpop.f32.mrf.mxu0
        %v1228 = vadd.f32 %v1156, %v1227
        %1229 = vmatmul.f32.gmra.mxu0 %v1173
        %v1230 = vpop.f32.mrf.mxu0
        %v1231 = vadd.f32 %v1161, %v1230
        %1232 = vdwg.mxu0
        %v1233 = vmax.f32 %v1193, 0.0
        %v1234 = vmax.f32 %v1222, 0.0
        %v1235 = vmax.f32 %v1196, 0.0
        %v1236 = vmax.f32 %v1225, 0.0
        %v1237 = vmax.f32 %v1199, 0.0
        %v1238 = vmax.f32 %v1228, 0.0
        %v1239 = vmax.f32 %v1202, 0.0
        %v1240 = vmax.f32 %v1231, 0.0
        %v1241 = vld [vmem:[%s3] sm:$0x7]
        %v1242 = vld [vmem:[%s4] sm:$0x7]
        %1244 = vset.pattern.permute.xlu0 0
        %1245 = vperm.xlu0 %1244, %v1242
        %v1246 = vpop.permute.xlu0 %1245
        %v1249 = vsel %vm489, %v1241, 0
        %1251 = vmatpush.msra.mxu0 0.0
        %1252 = vmatpush.msra.mxu0 0.0
        %1253 = vmatpush.msra.mxu0 0.0
        %1254 = vmatpush.msra.mxu0 0.0
        %1255 = vmatpush.msra.mxu0 0.0
        %1256 = vmatpush.msra.mxu0 0.0
        %1257 = vmatpush.msra.mxu0 0.0
        %1258 = vmatpush.msra.mxu0 0.0
        %1259 = vmatpush.msra.mxu0 0.0
        %1260 = vmatpush.msra.mxu0 0.0
        %1261 = vmatpush.msra.mxu0 0.0
        %1262 = vmatpush.msra.mxu0 0.0
        %1263 = vmatpush.msra.mxu0 %v1239
        %1264 = vmatpush.msra.mxu0 %v1237
        %1265 = vmatpush.msra.mxu0 %v1235
        %1266 = vmatpush.msra.mxu0 %v1233
        %1267 = vmatmul.f32.gmra.mxu0 %v1249
        %v1268 = vpop.f32.mrf.mxu0
        %v1269 = vadd.f32 %v1246, %v1268
        %1270 = vdwg.mxu0
        %1271 = vmatpush.msra.mxu0 0.0
        %1272 = vmatpush.msra.mxu0 0.0
        %1273 = vmatpush.msra.mxu0 0.0
        %1274 = vmatpush.msra.mxu0 0.0
        %1275 = vmatpush.msra.mxu0 0.0
        %1276 = vmatpush.msra.mxu0 0.0
        %1277 = vmatpush.msra.mxu0 0.0
        %1278 = vmatpush.msra.mxu0 0.0
        %1279 = vmatpush.msra.mxu0 0.0
        %1280 = vmatpush.msra.mxu0 0.0
        %1281 = vmatpush.msra.mxu0 0.0
        %1282 = vmatpush.msra.mxu0 0.0
        %1283 = vmatpush.msra.mxu0 %v1240
        %1284 = vmatpush.msra.mxu0 %v1238
        %1285 = vmatpush.msra.mxu0 %v1236
        %1286 = vmatpush.msra.mxu0 %v1234
        %1287 = vmatmul.f32.gmra.mxu0 %v1249
        %v1288 = vpop.f32.mrf.mxu0
        %v1289 = vadd.f32 %v1246, %v1288
        %1290 = vdwg.mxu0
        %v1293 = vrot.slane %v1289, 4
        %v1294 = vsel %vm1130, %v1269, %v1293
        %1296 = vst [vmem:[%s246] sm:$0x77] %v1294
        %p1297 = scmp.lt.s32.totalorder %s19, 1
        %s1298 = scalar_select %p1297, %s19, 1
        %s1299 = smul.addr %s1298, 2
        %s1300 = smul.addr %s1299, 4
        %s1301 = scalar_lea.vmem %s5, %s1300
        // Predicated region
        $region45: #{tpu_custom_call.1} parent=39 // pred_check
          %p1302 = pneg %p147
        $region46: #{tpu_custom_call.1} parent=39 // pred_check_branch
          %1304 = sbr.rel (%p1302) target = $region48
        $region47: #{tpu_custom_call.1} parent=39 // pred_region
          _
        $region48: #{tpu_custom_call.1} parent=39 // pred_fallthru
          _
      $region40: #{tpu_custom_call.1} parent=5 // pred_fallthru
        _
      %p1305 = scmp.le.s32.totalorder 2, %s14
      // Predicated region
      $region49: #{tpu_custom_call.1} parent=5 // pred_check
        %p1306 = pneg %p1305
      $region50: #{tpu_custom_call.1} parent=5 // pred_check_branch
        %1308 = sbr.rel (%p1306) target = $region52
      $region51: #{tpu_custom_call.1} parent=5 // pred_region
        %s1309 = ssub.s32 %s14, 2
        // Predicated region
        $region53: #{tpu_custom_call.1} parent=51 // pred_check
          %p1310 = pneg %p153
        $region54: #{tpu_custom_call.1} parent=51 // pred_check_branch
          %1312 = sbr.rel (%p1310) target = $region56
        $region55: #{tpu_custom_call.1} parent=51 // pred_region
          %p1313 = scmp.lt.s32.totalorder %s20, 1
          %s1314 = scalar_select %p1313, %s20, 1
          %s1315 = smul.addr %s1314, 2
          %s1316 = smul.addr %s1315, 4
          %s1317 = scalar_lea.vmem %s5, %s1316
        $region56: #{tpu_custom_call.1} parent=51 // pred_fallthru
          _
      $region52: #{tpu_custom_call.1} parent=5 // pred_fallthru
        _
    $region6: #{tpu_custom_call.1} parent=1 // loop_footer
      %s18 = sadd.s32 1, %s14
    $region7: #{tpu_custom_call.1} parent=1 // loop_footer_branch
      %13 = sbr.rel target = $region3
    $region8: #{tpu_custom_call.1} parent=1 // loop_exit
      _
    %1318 = vsyncpa [#allocation4], 1
    %s1319 = scalar_lea.sflag [#allocation4], 1
    %1320 = vsyncpa %s1319, 1

</llo_original>
